<compile_context>
chip_gen: v7x
topology: tpu7x:2x2x1
jax: 0.10.0
libtpu: 0.0.40
codegen_flags: <defaults>
</compile_context>

<pallas_src>
import jax
import jax.numpy as jnp
from jax.experimental import pallas as pl
from jax.experimental.pallas import tpu as pltpu


def _round_up(n, m):
    return ((n + m - 1) // m) * m


def _padded_bytes(rows, cols, itemsize):
    # VMEM tile padding: sublanes pad to 32/itemsize (8 for f32, 16 for bf16),
    # lanes pad to 128.
    sublane = 32 // itemsize
    return _round_up(rows, sublane) * _round_up(cols, 128) * itemsize


def _choose_tile_b(B):
    """Batch-tile size, tuned per TPU generation."""
    kind = ""
    try:
        kind = jax.devices()[0].device_kind.lower()
    except Exception:
        pass
    is_v7 = "v7" in kind
    num_tc = 2 if is_v7 else 1
    # v7x has only 64 MiB physical VMEM per TC -> keep per-step intermediates
    # smaller there; v5e/v6e have 128 MiB.
    max_tile = 4096 if is_v7 else 8192

    if num_tc == 1:
        # Single TensorCore: one block for modest B avoids ~0.35 us/step grid
        # overhead and keeps the MXU weight-stationary stream as long as it can.
        return min(_round_up(B, 128), max_tile)

    # v7x megacore: the batch axis is sharded across 2 TCs -> pick an even
    # (>= 2) number of grid steps so both cores get equal work.
    steps = _round_up(max(2, pl.cdiv(B, max_tile)), num_tc)
    return max(128, _round_up(pl.cdiv(B, steps), 128))


def routing_dqn_kernel(x_ref, w1_ref, b1_ref, w2_ref, b2_ref, w3_ref, b3_ref,
                       o_ref):
    # x block arrives in its native [tile_b, state_dim] f32 layout; cast to
    # bf16 in-kernel (MXU-native operands, f32 accumulate).
    x = x_ref[...].astype(jnp.bfloat16)
    # Layer 1: relu(x @ W1^T + b1) -> [tile_b, 128]
    h1 = jnp.dot(x, w1_ref[...], preferred_element_type=jnp.float32)
    h1 = jnp.maximum(h1 + b1_ref[...], 0.0).astype(jnp.bfloat16)
    # Layer 2: relu(h1 @ W2^T + b2) -> [tile_b, 64]
    h2 = jnp.dot(h1, w2_ref[...], preferred_element_type=jnp.float32)
    h2 = jnp.maximum(h2 + b2_ref[...], 0.0).astype(jnp.bfloat16)
    # Layer 3: h2 @ W3^T + b3 -> [tile_b, action_dim], stored in module-native
    # [batch, action_dim] layout (no wrapper transpose needed).
    o_ref[...] = (jnp.dot(h2, w3_ref[...], preferred_element_type=jnp.float32)
                  + b3_ref[...]).astype(o_ref.dtype)


def reference_forward(x, params):
    """Pure-JAX f32 reference matching the PyTorch module (also the
    small-batch fast path)."""
    h1 = jnp.maximum(x @ params["w1"].T + params["b1"], 0.0)
    h2 = jnp.maximum(h1 @ params["w2"].T + params["b2"], 0.0)
    return h2 @ params["w3"].T + params["b3"]


def routing_dqn_forward(x, params, *, min_pallas_batch=128):
    """x: [B, state_dim] f32. params: w{1,2,3} as [out, in], b{1,2,3} as [out].

    Returns [B, action_dim] f32.
    """
    x = x.astype(jnp.float32)
    B, state_dim = x.shape
    hidden1 = params["w1"].shape[0]
    hidden2 = params["w2"].shape[0]
    action_dim = params["w3"].shape[0]

    # Latency-bound small batches: skip the pallas_call entirely.
    if B < min_pallas_batch:
        return reference_forward(x, params)

    tile_b = _choose_tile_b(B)
    grid = (pl.cdiv(B, tile_b),)

    # Weights -> [in, out] bf16 (tiny, resident in VMEM for the whole grid);
    # biases -> [1, out] f32, added to the f32 MXU accumulator.
    w1 = params["w1"].T.astype(jnp.bfloat16)
    w2 = params["w2"].T.astype(jnp.bfloat16)
    w3 = params["w3"].T.astype(jnp.bfloat16)
    b1 = params["b1"].reshape(1, hidden1).astype(jnp.float32)
    b2 = params["b2"].reshape(1, hidden2).astype(jnp.float32)
    b3 = params["b3"].reshape(1, action_dim).astype(jnp.float32)

    in_specs = [
        pl.BlockSpec((tile_b, state_dim), lambda i: (i, 0)),     # x (native f32)
        pl.BlockSpec((state_dim, hidden1), lambda i: (0, 0)),    # w1 (resident)
        pl.BlockSpec((1, hidden1), lambda i: (0, 0)),            # b1
        pl.BlockSpec((hidden1, hidden2), lambda i: (0, 0)),      # w2
        pl.BlockSpec((1, hidden2), lambda i: (0, 0)),            # b2
        pl.BlockSpec((hidden2, action_dim), lambda i: (0, 0)),   # w3
        pl.BlockSpec((1, action_dim), lambda i: (0, 0)),         # b3
    ]
    out_spec = pl.BlockSpec((tile_b, action_dim), lambda i: (i, 0))

    # VMEM budget: double-buffered x/out blocks + resident weights/biases +
    # live intermediates, with dtype-correct sublane/lane padding + headroom.
    is_v7 = "v7" in (jax.devices()[0].device_kind.lower()
                     if jax.devices() else "")
    vmem_cap = (48 << 20) if is_v7 else (96 << 20)
    vmem_bytes = (
        2 * _padded_bytes(tile_b, state_dim, 4)                 # x double buffer
        + 2 * _padded_bytes(tile_b, action_dim, 4)              # out double buffer
        + 2 * (_padded_bytes(state_dim, hidden1, 2)
               + _padded_bytes(hidden1, hidden2, 2)
               + _padded_bytes(hidden2, action_dim, 2)
               + _padded_bytes(1, hidden1, 4)
               + _padded_bytes(1, hidden2, 4)
               + _padded_bytes(1, action_dim, 4))               # weights/biases
        + _padded_bytes(tile_b, state_dim, 2)                   # x bf16 cast
        + _padded_bytes(tile_b, hidden1, 4)                     # h1 f32 acc
        + _padded_bytes(tile_b, hidden1, 2)                     # h1 bf16
        + _padded_bytes(tile_b, hidden2, 4)                     # h2 f32 acc
        + _padded_bytes(tile_b, hidden2, 2)                     # h2 bf16
        + (8 << 20)                                             # headroom
    )
    vmem_bytes = int(min(vmem_bytes, vmem_cap))

    return pl.pallas_call(
        routing_dqn_kernel,
        out_shape=jax.ShapeDtypeStruct((B, action_dim), jnp.float32),
        grid_spec=pl.GridSpec(grid=grid, in_specs=in_specs, out_specs=out_spec),
        compiler_params=pltpu.CompilerParams(
            dimension_semantics=("parallel",),
            vmem_limit_bytes=vmem_bytes),
    )(x, w1, b1, w2, b2, w3, b3)


def init_params(key, state_dim, action_dim):
    """Mirror nn.Linear default init; weights [out, in], biases [out]."""
    dims = [(state_dim, 128), (128, 64), (64, action_dim)]
    params = {}
    for idx, (fan_in, fan_out) in enumerate(dims, start=1):
        key, kw, kb = jax.random.split(key, 3)
        bound = 1.0 / jnp.sqrt(jnp.float32(fan_in))
        params[f"w{idx}"] = jax.random.uniform(
            kw, (fan_out, fan_in), jnp.float32, -bound, bound)
        params[f"b{idx}"] = jax.random.uniform(
            kb, (fan_out,), jnp.float32, -bound, bound)
    return params


if __name__ == "__main__":
    key = jax.random.PRNGKey(0)
    state_dim, action_dim = 32, 8

    key, pkey = jax.random.split(key)
    params = init_params(pkey, state_dim, action_dim)

    # Throughput path: batch large enough to exercise the Pallas kernel.
    key, kx = jax.random.split(key)
    x_big = jax.random.normal(kx, (256, state_dim), jnp.float32)
    out_big = jax.block_until_ready(routing_dqn_forward(x_big, params))
    ref_big = reference_forward(x_big, params)
    assert out_big.shape == (256, action_dim)
    # bf16 matmul operands (f32 accumulate) -> relaxed tolerance vs f32 ref.
    assert jnp.allclose(out_big, ref_big, atol=5e-2, rtol=5e-2), (
        f"max abs err {jnp.max(jnp.abs(out_big - ref_big))}")

    # Latency path: tiny batch takes the pure-JAX fast path (no pad / launch).
    key, kx2 = jax.random.split(key)
    x_small = jax.random.normal(kx2, (8, state_dim), jnp.float32)
    out_small = jax.block_until_ready(routing_dqn_forward(x_small, params))
    assert out_small.shape == (8, action_dim)
    assert jnp.allclose(out_small, reference_forward(x_small, params),
                        atol=1e-4, rtol=1e-4)

    print("KERNEL_OK")
</pallas_src>

<mosaic_0001>
module attributes {stable_mosaic.version = 11 : i64} {
  func.func @routing_dqn_kernel(%arg0: i32, %arg1: memref<256x32xf32, #tpu.memory_space<vmem>>, %arg2: memref<32x128xbf16, #tpu.memory_space<vmem>>, %arg3: memref<1x128xf32, #tpu.memory_space<vmem>>, %arg4: memref<128x64xbf16, #tpu.memory_space<vmem>>, %arg5: memref<1x64xf32, #tpu.memory_space<vmem>>, %arg6: memref<64x8xbf16, #tpu.memory_space<vmem>>, %arg7: memref<1x8xf32, #tpu.memory_space<vmem>>, %arg8: memref<256x8xf32, #tpu.memory_space<vmem>>) attributes {dimension_semantics = [#tpu.dimension_semantics<parallel>], iteration_bounds = array<i64: 1>, scalar_prefetch = 0 : i64, scratch_operands = 0 : i64, tpu.core_type = #tpu.core_type<tc>, window_params = [{transform_indices = @transform_0, window_bounds = array<i64: 256, 32>}, {pipeline_mode = #tpu.pipeline_mode<synchronous>, transform_indices = @transform_1, window_bounds = array<i64: 32, 128>}, {pipeline_mode = #tpu.pipeline_mode<synchronous>, transform_indices = @transform_2, window_bounds = array<i64: 1, 128>}, {pipeline_mode = #tpu.pipeline_mode<synchronous>, transform_indices = @transform_3, window_bounds = array<i64: 128, 64>}, {pipeline_mode = #tpu.pipeline_mode<synchronous>, transform_indices = @transform_4, window_bounds = array<i64: 1, 64>}, {pipeline_mode = #tpu.pipeline_mode<synchronous>, transform_indices = @transform_5, window_bounds = array<i64: 64, 8>}, {pipeline_mode = #tpu.pipeline_mode<synchronous>, transform_indices = @transform_6, window_bounds = array<i64: 1, 8>}, {transform_indices = @transform_7, window_bounds = array<i64: 256, 8>}]} {
    %c0 = arith.constant 0 : index
    %c0_0 = arith.constant 0 : index
    %0 = vector.load %arg1[%c0, %c0_0] : memref<256x32xf32, #tpu.memory_space<vmem>>, vector<256x32xf32>
    %1 = arith.truncf %0 : vector<256x32xf32> to vector<256x32xbf16>
    %c0_1 = arith.constant 0 : index
    %c0_2 = arith.constant 0 : index
    %2 = vector.load %arg2[%c0_1, %c0_2] : memref<32x128xbf16, #tpu.memory_space<vmem>>, vector<32x128xbf16>
    %cst = arith.constant dense<0.000000e+00> : vector<256x128xf32>
    %3 = tpu.matmul %1, %2, %cst {dimension_numbers = #tpu.dot_dimension_numbers<[1], [0], [0], [1], [0, 0, 1, 1], [], []>} : vector<256x32xbf16>, vector<32x128xbf16>, vector<256x128xf32> -> vector<256x128xf32>
    %c0_3 = arith.constant 0 : index
    %c0_4 = arith.constant 0 : index
    %4 = vector.load %arg3[%c0_3, %c0_4] : memref<1x128xf32, #tpu.memory_space<vmem>>, vector<1x128xf32>
    %5 = vector.broadcast %4 : vector<1x128xf32> to vector<256x128xf32>
    %6 = arith.addf %3, %5 : vector<256x128xf32>
    %cst_5 = arith.constant 0.000000e+00 : f32
    %7 = vector.broadcast %cst_5 : f32 to vector<256x128xf32>
    %8 = arith.maximumf %6, %7 : vector<256x128xf32>
    %9 = arith.truncf %8 : vector<256x128xf32> to vector<256x128xbf16>
    %c0_6 = arith.constant 0 : index
    %c0_7 = arith.constant 0 : index
    %10 = vector.load %arg4[%c0_6, %c0_7] : memref<128x64xbf16, #tpu.memory_space<vmem>>, vector<128x64xbf16>
    %cst_8 = arith.constant dense<0.000000e+00> : vector<256x64xf32>
    %11 = tpu.matmul %9, %10, %cst_8 {dimension_numbers = #tpu.dot_dimension_numbers<[1], [0], [0], [1], [0, 0, 1, 1], [], []>} : vector<256x128xbf16>, vector<128x64xbf16>, vector<256x64xf32> -> vector<256x64xf32>
    %c0_9 = arith.constant 0 : index
    %c0_10 = arith.constant 0 : index
    %12 = vector.load %arg5[%c0_9, %c0_10] : memref<1x64xf32, #tpu.memory_space<vmem>>, vector<1x64xf32>
    %13 = vector.broadcast %12 : vector<1x64xf32> to vector<256x64xf32>
    %14 = arith.addf %11, %13 : vector<256x64xf32>
    %cst_11 = arith.constant 0.000000e+00 : f32
    %15 = vector.broadcast %cst_11 : f32 to vector<256x64xf32>
    %16 = arith.maximumf %14, %15 : vector<256x64xf32>
    %17 = arith.truncf %16 : vector<256x64xf32> to vector<256x64xbf16>
    %c0_12 = arith.constant 0 : index
    %c0_13 = arith.constant 0 : index
    %18 = vector.load %arg6[%c0_12, %c0_13] : memref<64x8xbf16, #tpu.memory_space<vmem>>, vector<64x8xbf16>
    %cst_14 = arith.constant dense<0.000000e+00> : vector<256x8xf32>
    %19 = tpu.matmul %17, %18, %cst_14 {dimension_numbers = #tpu.dot_dimension_numbers<[1], [0], [0], [1], [0, 0, 1, 1], [], []>} : vector<256x64xbf16>, vector<64x8xbf16>, vector<256x8xf32> -> vector<256x8xf32>
    %c0_15 = arith.constant 0 : index
    %c0_16 = arith.constant 0 : index
    %20 = vector.load %arg7[%c0_15, %c0_16] : memref<1x8xf32, #tpu.memory_space<vmem>>, vector<1x8xf32>
    %21 = vector.broadcast %20 : vector<1x8xf32> to vector<256x8xf32>
    %22 = arith.addf %19, %21 : vector<256x8xf32>
    %c0_17 = arith.constant 0 : index
    %c0_18 = arith.constant 0 : index
    %23 = vector.load %arg8[%c0_17, %c0_18] : memref<256x8xf32, #tpu.memory_space<vmem>>, vector<256x8xf32>
    tpu.vector_store %arg8[%c0_17, %c0_18], %22 {strides = array<i32>} : memref<256x8xf32, #tpu.memory_space<vmem>>, vector<256x8xf32>,
    return
  }
  func.func @transform_0(%arg0: i32) -> (i32, i32) {
    %c0_i32 = arith.constant 0 : i32
    %c0_i32_0 = arith.constant 0 : i32
    return %arg0, %c0_i32 : i32, i32
  }
  func.func @transform_1(%arg0: i32) -> (i32, i32) {
    %c0_i32 = arith.constant 0 : i32
    %c0_i32_0 = arith.constant 0 : i32
    %c0_i32_1 = arith.constant 0 : i32
    return %c0_i32, %c0_i32_0 : i32, i32
  }
  func.func @transform_2(%arg0: i32) -> (i32, i32) {
    %c0_i32 = arith.constant 0 : i32
    %c0_i32_0 = arith.constant 0 : i32
    %c0_i32_1 = arith.constant 0 : i32
    return %c0_i32, %c0_i32_0 : i32, i32
  }
  func.func @transform_3(%arg0: i32) -> (i32, i32) {
    %c0_i32 = arith.constant 0 : i32
    %c0_i32_0 = arith.constant 0 : i32
    %c0_i32_1 = arith.constant 0 : i32
    return %c0_i32, %c0_i32_0 : i32, i32
  }
  func.func @transform_4(%arg0: i32) -> (i32, i32) {
    %c0_i32 = arith.constant 0 : i32
    %c0_i32_0 = arith.constant 0 : i32
    %c0_i32_1 = arith.constant 0 : i32
    return %c0_i32, %c0_i32_0 : i32, i32
  }
  func.func @transform_5(%arg0: i32) -> (i32, i32) {
    %c0_i32 = arith.constant 0 : i32
    %c0_i32_0 = arith.constant 0 : i32
    %c0_i32_1 = arith.constant 0 : i32
    return %c0_i32, %c0_i32_0 : i32, i32
  }
  func.func @transform_6(%arg0: i32) -> (i32, i32) {
    %c0_i32 = arith.constant 0 : i32
    %c0_i32_0 = arith.constant 0 : i32
    %c0_i32_1 = arith.constant 0 : i32
    return %c0_i32, %c0_i32_0 : i32, i32
  }
  func.func @transform_7(%arg0: i32) -> (i32, i32) {
    %c0_i32 = arith.constant 0 : i32
    %c0_i32_0 = arith.constant 0 : i32
    return %arg0, %c0_i32 : i32, i32
  }
}

</mosaic_0001>

<llo_original>
// kernel: tpu_custom_call.1
$region0: #{tpu_custom_call.1}
  #allocation0 [shape = 'u32[]', space=smem, size = 0x4, offset = 0x4, fixed_abs, tag = 'smem constant byte address 0x4 - core index']
  #allocation1 [shape = 'u32[144,128]{1,0:T(1,128)}', space=vmem, size = 0x12000, scoped, tag = 'internal scratch']
  %s0 = inlined_call_operand.vmem [shape: f32[256,32], index: 0, kind: input, shape index: {}]
  %s1 = inlined_call_operand.vmem [shape: bf16[32,128], index: 1, kind: input, shape index: {}]
  %s2 = inlined_call_operand.vmem [shape: f32[1,128], index: 2, kind: input, shape index: {}]
  %s3 = inlined_call_operand.vmem [shape: bf16[128,64], index: 3, kind: input, shape index: {}]
  %s4 = inlined_call_operand.vmem [shape: f32[1,64], index: 4, kind: input, shape index: {}]
  %s5 = inlined_call_operand.vmem [shape: bf16[64,8], index: 5, kind: input, shape index: {}]
  %s6 = inlined_call_operand.vmem [shape: f32[1,8], index: 6, kind: input, shape index: {}]
  %s7 = inlined_call_operand.vmem [shape: f32[256,8], index: 7, kind: output, shape index: {}]
  %s8 = sld [smem:[#allocation0]]
  $region38: #{tpu_custom_call.1} parent=0
    _
  %s10 = ssub.s32 1, %s8
  %s11 = scalar_select 0, %s10, %s8
  // Predicated region
  $region2: #{tpu_custom_call.1} parent=0 // pred_check
    _
  $region3: #{tpu_custom_call.1} parent=0 // pred_check_branch
    %13 = sbr.rel (0) target = $region5
  $region4: #{tpu_custom_call.1} parent=0 // pred_region
    _
  $region5: #{tpu_custom_call.1} parent=0 // pred_fallthru
    _
  // Predicated region
  $region6: #{tpu_custom_call.1} parent=0 // pred_check
    _
  $region7: #{tpu_custom_call.1} parent=0 // pred_check_branch
    %15 = sbr.rel (0) target = $region9
  $region8: #{tpu_custom_call.1} parent=0 // pred_region
    _
  $region9: #{tpu_custom_call.1} parent=0 // pred_fallthru
    _
  // Predicated region
  $region10: #{tpu_custom_call.1} parent=0 // pred_check
    _
  $region11: #{tpu_custom_call.1} parent=0 // pred_check_branch
    %17 = sbr.rel (0) target = $region13
  $region12: #{tpu_custom_call.1} parent=0 // pred_region
    _
  $region13: #{tpu_custom_call.1} parent=0 // pred_fallthru
    _
  // Predicated region
  $region14: #{tpu_custom_call.1} parent=0 // pred_check
    _
  $region15: #{tpu_custom_call.1} parent=0 // pred_check_branch
    %19 = sbr.rel (0) target = $region17
  $region16: #{tpu_custom_call.1} parent=0 // pred_region
    _
  $region17: #{tpu_custom_call.1} parent=0 // pred_fallthru
    _
  // Predicated region
  $region18: #{tpu_custom_call.1} parent=0 // pred_check
    _
  $region19: #{tpu_custom_call.1} parent=0 // pred_check_branch
    %21 = sbr.rel (0) target = $region21
  $region20: #{tpu_custom_call.1} parent=0 // pred_region
    _
  $region21: #{tpu_custom_call.1} parent=0 // pred_fallthru
    _
  // Predicated region
  $region22: #{tpu_custom_call.1} parent=0 // pred_check
    _
  $region23: #{tpu_custom_call.1} parent=0 // pred_check_branch
    %23 = sbr.rel (0) target = $region25
  $region24: #{tpu_custom_call.1} parent=0 // pred_region
    _
  $region25: #{tpu_custom_call.1} parent=0 // pred_fallthru
    _
  // Predicated region
  $region26: #{tpu_custom_call.1} parent=0 // pred_check
    _
  $region27: #{tpu_custom_call.1} parent=0 // pred_check_branch
    %25 = sbr.rel (0) target = $region29
  $region28: #{tpu_custom_call.1} parent=0 // pred_region
    _
  $region29: #{tpu_custom_call.1} parent=0 // pred_fallthru
    _
  %v27 = vld [vmem:[%s0] sm:$0xff]
  %v28 = vld [vmem:[%s0 + $0x8] sm:$0xff]
  %v29 = vld [vmem:[%s0 + $0x10] sm:$0xff]
  %v30 = vld [vmem:[%s0 + $0x18] sm:$0xff]
  %v31 = vld [vmem:[%s0 + $0x20] sm:$0xff]
  %v32 = vld [vmem:[%s0 + $0x28] sm:$0xff]
  %v33 = vld [vmem:[%s0 + $0x30] sm:$0xff]
  %v34 = vld [vmem:[%s0 + $0x38] sm:$0xff]
  %v35 = vld [vmem:[%s0 + $0x40] sm:$0xff]
  %v36 = vld [vmem:[%s0 + $0x48] sm:$0xff]
  %v37 = vld [vmem:[%s0 + $0x50] sm:$0xff]
  %v38 = vld [vmem:[%s0 + $0x58] sm:$0xff]
  %v39 = vld [vmem:[%s0 + $0x60] sm:$0xff]
  %v40 = vld [vmem:[%s0 + $0x68] sm:$0xff]
  %v41 = vld [vmem:[%s0 + $0x70] sm:$0xff]
  %v42 = vld [vmem:[%s0 + $0x78] sm:$0xff]
  %v43 = vld [vmem:[%s0 + $0x80] sm:$0xff]
  %v44 = vld [vmem:[%s0 + $0x88] sm:$0xff]
  %v45 = vld [vmem:[%s0 + $0x90] sm:$0xff]
  %v46 = vld [vmem:[%s0 + $0x98] sm:$0xff]
  %v47 = vld [vmem:[%s0 + $0xa0] sm:$0xff]
  %v48 = vld [vmem:[%s0 + $0xa8] sm:$0xff]
  %v49 = vld [vmem:[%s0 + $0xb0] sm:$0xff]
  %v50 = vld [vmem:[%s0 + $0xb8] sm:$0xff]
  %v51 = vld [vmem:[%s0 + $0xc0] sm:$0xff]
  %v52 = vld [vmem:[%s0 + $0xc8] sm:$0xff]
  %v53 = vld [vmem:[%s0 + $0xd0] sm:$0xff]
  %v54 = vld [vmem:[%s0 + $0xd8] sm:$0xff]
  %v55 = vld [vmem:[%s0 + $0xe0] sm:$0xff]
  %v56 = vld [vmem:[%s0 + $0xe8] sm:$0xff]
  %v57 = vld [vmem:[%s0 + $0xf0] sm:$0xff]
  %v58 = vld [vmem:[%s0 + $0xf8] sm:$0xff]
  %v59 = vpack.c.bf16 %v28, %v27
  %v60 = vpack.c.bf16 %v30, %v29
  %v61 = vpack.c.bf16 %v32, %v31
  %v62 = vpack.c.bf16 %v34, %v33
  %v63 = vpack.c.bf16 %v36, %v35
  %v64 = vpack.c.bf16 %v38, %v37
  %v65 = vpack.c.bf16 %v40, %v39
  %v66 = vpack.c.bf16 %v42, %v41
  %v67 = vpack.c.bf16 %v44, %v43
  %v68 = vpack.c.bf16 %v46, %v45
  %v69 = vpack.c.bf16 %v48, %v47
  %v70 = vpack.c.bf16 %v50, %v49
  %v71 = vpack.c.bf16 %v52, %v51
  %v72 = vpack.c.bf16 %v54, %v53
  %v73 = vpack.c.bf16 %v56, %v55
  %v74 = vpack.c.bf16 %v58, %v57
  %v75 = vld [vmem:[%s1] sm:$0xf]
  %v76 = vld [vmem:[%s1 + $0x4] sm:$0xf]
  %v77 = vld [vmem:[%s1 + $0x8] sm:$0xf]
  %v78 = vld [vmem:[%s1 + $0xc] sm:$0xf]
  %v79 = vld [vmem:[%s2] sm:$0x1]
  %v81 = vlaneseq
  %v82 = vshrl.u32 %v81, 7
  %v83 = vsub.s32 0, %v82
  %v84 = vrot.slane %v79, %v83
  %v90 = vunpack.c.l.b16 %v75
  %v91 = vunpack.c.l.b16 %v76
  %v92 = vunpack.c.l.b16 %v77
  %v93 = vunpack.c.l.b16 %v78
  %v94 = vpack.c.b16 %v91, %v90
  %v95 = vpack.c.b16 %v93, %v92
  %vm98 = vcmask 261120
  %v100 = vsel %vm98, %v59, 0
  %v103 = vsel %vm98, %v60, 0
  %v106 = vsel %vm98, %v61, 0
  %v109 = vsel %vm98, %v62, 0
  %v112 = vsel %vm98, %v63, 0
  %v115 = vsel %vm98, %v64, 0
  %v118 = vsel %vm98, %v65, 0
  %v121 = vsel %vm98, %v66, 0
  %v124 = vsel %vm98, %v67, 0
  %v127 = vsel %vm98, %v68, 0
  %v130 = vsel %vm98, %v69, 0
  %v133 = vsel %vm98, %v70, 0
  %v136 = vsel %vm98, %v71, 0
  %v139 = vsel %vm98, %v72, 0
  %v142 = vsel %vm98, %v73, 0
  %v145 = vsel %vm98, %v74, 0
  %147 = vmatprep.subr.bf16.mxu0 0
  %148 = vmatpush1.bf16.msra.mxu0 %v94
  %149 = vmatprep.subr.bf16.mxu0 0
  %150 = vmatpush1.bf16.msra.mxu0 %v95
  %151 = vmatprep.subr.bf16.mxu0 0
  %152 = vmatpush1.bf16.msra.mxu0 0
  %153 = vmatprep.subr.bf16.mxu0 0
  %154 = vmatpush1.bf16.msra.mxu0 0
  %155 = vmatprep.subr.bf16.mxu0 0
  %156 = vmatpush1.bf16.msra.mxu0 0
  %157 = vmatprep.subr.bf16.mxu0 0
  %158 = vmatpush1.bf16.msra.mxu0 0
  %159 = vmatprep.subr.bf16.mxu0 0
  %160 = vmatpush1.bf16.msra.mxu0 0
  %161 = vmatprep.subr.bf16.mxu0 0
  %162 = vmatpush1.bf16.msra.mxu0 0
  %163 = vmatprep.subr.bf16.mxu0 0
  %164 = vmatpush1.bf16.msra.mxu0 0
  %165 = vmatprep.subr.bf16.mxu0 0
  %166 = vmatpush1.bf16.msra.mxu0 0
  %167 = vmatprep.subr.bf16.mxu0 0
  %168 = vmatpush1.bf16.msra.mxu0 0
  %169 = vmatprep.subr.bf16.mxu0 0
  %170 = vmatpush1.bf16.msra.mxu0 0
  %171 = vmatprep.subr.bf16.mxu0 0
  %172 = vmatpush1.bf16.msra.mxu0 0
  %173 = vmatprep.subr.bf16.mxu0 0
  %174 = vmatpush1.bf16.msra.mxu0 0
  %175 = vmatprep.subr.bf16.mxu0 0
  %176 = vmatpush1.bf16.msra.mxu0 0
  %177 = vmatprep.subr.bf16.mxu0 0
  %178 = vmatpush1.bf16.msra.mxu0 0
  %179 = vmatprep.mubr.bf16.mxu0 0
  %180 = vmatmul.mubr.bf16.gmra.mrb[0].mxu0 %v100
  %v181 = vpop.f32.mrb[0].mxu0
  %v182 = vadd.f32 %v84, %v181
  %v183 = vpop.f32.mrb[0].mxu0
  %v184 = vpop.f32.mrb[0].mxu0
  %v185 = vadd.f32 %v84, %v184
  %v186 = vpop.f32.mrb[0].mxu0
  %187 = vmatprep.mubr.bf16.mxu0 0
  %188 = vmatmul.mubr.bf16.gmra.mrb[0].mxu0 %v103
  %v189 = vpop.f32.mrb[0].mxu0
  %v190 = vadd.f32 %v84, %v189
  %v191 = vpop.f32.mrb[0].mxu0
  %v192 = vpop.f32.mrb[0].mxu0
  %v193 = vadd.f32 %v84, %v192
  %v194 = vpop.f32.mrb[0].mxu0
  %195 = vmatprep.mubr.bf16.mxu0 0
  %196 = vmatmul.mubr.bf16.gmra.mrb[0].mxu0 %v106
  %v197 = vpop.f32.mrb[0].mxu0
  %v198 = vadd.f32 %v84, %v197
  %v199 = vpop.f32.mrb[0].mxu0
  %v200 = vpop.f32.mrb[0].mxu0
  %v201 = vadd.f32 %v84, %v200
  %v202 = vpop.f32.mrb[0].mxu0
  %203 = vmatprep.mubr.bf16.mxu0 0
  %204 = vmatmul.mubr.bf16.gmra.mrb[0].mxu0 %v109
  %v205 = vpop.f32.mrb[0].mxu0
  %v206 = vadd.f32 %v84, %v205
  %v207 = vpop.f32.mrb[0].mxu0
  %v208 = vpop.f32.mrb[0].mxu0
  %v209 = vadd.f32 %v84, %v208
  %v210 = vpop.f32.mrb[0].mxu0
  %211 = vmatprep.mubr.bf16.mxu0 0
  %212 = vmatmul.mubr.bf16.gmra.mrb[0].mxu0 %v112
  %v213 = vpop.f32.mrb[0].mxu0
  %v214 = vadd.f32 %v84, %v213
  %v215 = vpop.f32.mrb[0].mxu0
  %v216 = vpop.f32.mrb[0].mxu0
  %v217 = vadd.f32 %v84, %v216
  %v218 = vpop.f32.mrb[0].mxu0
  %219 = vmatprep.mubr.bf16.mxu0 0
  %220 = vmatmul.mubr.bf16.gmra.mrb[0].mxu0 %v115
  %v221 = vpop.f32.mrb[0].mxu0
  %v222 = vadd.f32 %v84, %v221
  %v223 = vpop.f32.mrb[0].mxu0
  %v224 = vpop.f32.mrb[0].mxu0
  %v225 = vadd.f32 %v84, %v224
  %v226 = vpop.f32.mrb[0].mxu0
  %227 = vmatprep.mubr.bf16.mxu0 0
  %228 = vmatmul.mubr.bf16.gmra.mrb[0].mxu0 %v118
  %v229 = vpop.f32.mrb[0].mxu0
  %v230 = vadd.f32 %v84, %v229
  %v231 = vpop.f32.mrb[0].mxu0
  %v232 = vpop.f32.mrb[0].mxu0
  %v233 = vadd.f32 %v84, %v232
  %v234 = vpop.f32.mrb[0].mxu0
  %235 = vmatprep.mubr.bf16.mxu0 0
  %236 = vmatmul.mubr.bf16.gmra.mrb[0].mxu0 %v121
  %v237 = vpop.f32.mrb[0].mxu0
  %v238 = vadd.f32 %v84, %v237
  %v239 = vpop.f32.mrb[0].mxu0
  %v240 = vpop.f32.mrb[0].mxu0
  %v241 = vadd.f32 %v84, %v240
  %v242 = vpop.f32.mrb[0].mxu0
  %243 = vmatprep.mubr.bf16.mxu0 0
  %244 = vmatmul.mubr.bf16.gmra.mrb[0].mxu0 %v124
  %v245 = vpop.f32.mrb[0].mxu0
  %v246 = vadd.f32 %v84, %v245
  %v247 = vpop.f32.mrb[0].mxu0
  %v248 = vpop.f32.mrb[0].mxu0
  %v249 = vadd.f32 %v84, %v248
  %v250 = vpop.f32.mrb[0].mxu0
  %251 = vmatprep.mubr.bf16.mxu0 0
  %252 = vmatmul.mubr.bf16.gmra.mrb[0].mxu0 %v127
  %v253 = vpop.f32.mrb[0].mxu0
  %v254 = vadd.f32 %v84, %v253
  %v255 = vpop.f32.mrb[0].mxu0
  %v256 = vpop.f32.mrb[0].mxu0
  %v257 = vadd.f32 %v84, %v256
  %v258 = vpop.f32.mrb[0].mxu0
  %259 = vmatprep.mubr.bf16.mxu0 0
  %260 = vmatmul.mubr.bf16.gmra.mrb[0].mxu0 %v130
  %v261 = vpop.f32.mrb[0].mxu0
  %v262 = vadd.f32 %v84, %v261
  %v263 = vpop.f32.mrb[0].mxu0
  %v264 = vpop.f32.mrb[0].mxu0
  %v265 = vadd.f32 %v84, %v264
  %v266 = vpop.f32.mrb[0].mxu0
  %267 = vmatprep.mubr.bf16.mxu0 0
  %268 = vmatmul.mubr.bf16.gmra.mrb[0].mxu0 %v133
  %v269 = vpop.f32.mrb[0].mxu0
  %v270 = vadd.f32 %v84, %v269
  %v271 = vpop.f32.mrb[0].mxu0
  %v272 = vpop.f32.mrb[0].mxu0
  %v273 = vadd.f32 %v84, %v272
  %v274 = vpop.f32.mrb[0].mxu0
  %275 = vmatprep.mubr.bf16.mxu0 0
  %276 = vmatmul.mubr.bf16.gmra.mrb[0].mxu0 %v136
  %v277 = vpop.f32.mrb[0].mxu0
  %v278 = vadd.f32 %v84, %v277
  %v279 = vpop.f32.mrb[0].mxu0
  %v280 = vpop.f32.mrb[0].mxu0
  %v281 = vadd.f32 %v84, %v280
  %v282 = vpop.f32.mrb[0].mxu0
  %283 = vmatprep.mubr.bf16.mxu0 0
  %284 = vmatmul.mubr.bf16.gmra.mrb[0].mxu0 %v139
  %v285 = vpop.f32.mrb[0].mxu0
  %v286 = vadd.f32 %v84, %v285
  %v287 = vpop.f32.mrb[0].mxu0
  %v288 = vpop.f32.mrb[0].mxu0
  %v289 = vadd.f32 %v84, %v288
  %v290 = vpop.f32.mrb[0].mxu0
  %291 = vmatprep.mubr.bf16.mxu0 0
  %292 = vmatmul.mubr.bf16.gmra.mrb[0].mxu0 %v142
  %v293 = vpop.f32.mrb[0].mxu0
  %v294 = vadd.f32 %v84, %v293
  %v295 = vpop.f32.mrb[0].mxu0
  %v296 = vpop.f32.mrb[0].mxu0
  %v297 = vadd.f32 %v84, %v296
  %v298 = vpop.f32.mrb[0].mxu0
  %299 = vmatprep.mubr.bf16.mxu0 0
  %300 = vmatmul.mubr.bf16.gmra.mrb[0].mxu0 %v145
  %v301 = vpop.f32.mrb[0].mxu0
  %v302 = vadd.f32 %v84, %v301
  %v303 = vpop.f32.mrb[0].mxu0
  %v304 = vpop.f32.mrb[0].mxu0
  %v305 = vadd.f32 %v84, %v304
  %v306 = vpop.f32.mrb[0].mxu0
  %307 = vdwg.mxu0
  %v308 = vmax.f32 %v182, 0.0
  %v309 = vmax.f32 %v185, 0.0
  %v310 = vmax.f32 %v190, 0.0
  %v311 = vmax.f32 %v193, 0.0
  %v312 = vmax.f32 %v198, 0.0
  %v313 = vmax.f32 %v201, 0.0
  %v314 = vmax.f32 %v206, 0.0
  %v315 = vmax.f32 %v209, 0.0
  %v316 = vmax.f32 %v214, 0.0
  %v317 = vmax.f32 %v217, 0.0
  %v318 = vmax.f32 %v222, 0.0
  %v319 = vmax.f32 %v225, 0.0
  %v320 = vmax.f32 %v230, 0.0
  %v321 = vmax.f32 %v233, 0.0
  %v322 = vmax.f32 %v238, 0.0
  %v323 = vmax.f32 %v241, 0.0
  %v324 = vmax.f32 %v246, 0.0
  %v325 = vmax.f32 %v249, 0.0
  %v326 = vmax.f32 %v254, 0.0
  %v327 = vmax.f32 %v257, 0.0
  %v328 = vmax.f32 %v262, 0.0
  %v329 = vmax.f32 %v265, 0.0
  %v330 = vmax.f32 %v270, 0.0
  %v331 = vmax.f32 %v273, 0.0
  %v332 = vmax.f32 %v278, 0.0
  %v333 = vmax.f32 %v281, 0.0
  %v334 = vmax.f32 %v286, 0.0
  %v335 = vmax.f32 %v289, 0.0
  %v336 = vmax.f32 %v294, 0.0
  %v337 = vmax.f32 %v297, 0.0
  %v338 = vmax.f32 %v302, 0.0
  %v339 = vmax.f32 %v305, 0.0
  %v340 = vpack.c.bf16 %v309, %v308
  %v341 = vpack.c.bf16 %v311, %v310
  %v342 = vpack.c.bf16 %v313, %v312
  %v343 = vpack.c.bf16 %v315, %v314
  %v344 = vpack.c.bf16 %v317, %v316
  %v345 = vpack.c.bf16 %v319, %v318
  %v346 = vpack.c.bf16 %v321, %v320
  %v347 = vpack.c.bf16 %v323, %v322
  %v348 = vpack.c.bf16 %v325, %v324
  %v349 = vpack.c.bf16 %v327, %v326
  %v350 = vpack.c.bf16 %v329, %v328
  %v351 = vpack.c.bf16 %v331, %v330
  %v352 = vpack.c.bf16 %v333, %v332
  %v353 = vpack.c.bf16 %v335, %v334
  %v354 = vpack.c.bf16 %v337, %v336
  %v355 = vpack.c.bf16 %v339, %v338
  %v356 = vld [vmem:[%s3] sm:$0xf]
  %v357 = vld [vmem:[%s3 + $0x4] sm:$0xf]
  %v358 = vld [vmem:[%s3 + $0x8] sm:$0xf]
  %v359 = vld [vmem:[%s3 + $0xc] sm:$0xf]
  %v360 = vld [vmem:[%s3 + $0x10] sm:$0xf]
  %v361 = vld [vmem:[%s3 + $0x14] sm:$0xf]
  %v362 = vld [vmem:[%s3 + $0x18] sm:$0xf]
  %v363 = vld [vmem:[%s3 + $0x1c] sm:$0xf]
  %v364 = vld [vmem:[%s3 + $0x20] sm:$0xf]
  %v365 = vld [vmem:[%s3 + $0x24] sm:$0xf]
  %v366 = vld [vmem:[%s3 + $0x28] sm:$0xf]
  %v367 = vld [vmem:[%s3 + $0x2c] sm:$0xf]
  %v368 = vld [vmem:[%s3 + $0x30] sm:$0xf]
  %v369 = vld [vmem:[%s3 + $0x34] sm:$0xf]
  %v370 = vld [vmem:[%s3 + $0x38] sm:$0xf]
  %v371 = vld [vmem:[%s3 + $0x3c] sm:$0xf]
  %v372 = vld [vmem:[%s4] sm:$0x1]
  %v374 = vlaneseq
  %v375 = vshrl.u32 %v374, 7
  %v376 = vsub.s32 0, %v375
  %v377 = vrot.slane %v372, %v376
  %v395 = vunpack.c.l.b16 %v356
  %v396 = vunpack.c.l.b16 %v357
  %v397 = vunpack.c.l.b16 %v358
  %v398 = vunpack.c.l.b16 %v359
  %v399 = vunpack.c.l.b16 %v360
  %v400 = vunpack.c.l.b16 %v361
  %v401 = vunpack.c.l.b16 %v362
  %v402 = vunpack.c.l.b16 %v363
  %v403 = vunpack.c.l.b16 %v364
  %v404 = vunpack.c.l.b16 %v365
  %v405 = vunpack.c.l.b16 %v366
  %v406 = vunpack.c.l.b16 %v367
  %v407 = vunpack.c.l.b16 %v368
  %v408 = vunpack.c.l.b16 %v369
  %v409 = vunpack.c.l.b16 %v370
  %v410 = vunpack.c.l.b16 %v371
  %v411 = vpack.c.b16 %v396, %v395
  %v412 = vpack.c.b16 %v398, %v397
  %v413 = vpack.c.b16 %v400, %v399
  %v414 = vpack.c.b16 %v402, %v401
  %v415 = vpack.c.b16 %v404, %v403
  %v416 = vpack.c.b16 %v406, %v405
  %v417 = vpack.c.b16 %v408, %v407
  %v418 = vpack.c.b16 %v410, %v409
  %427 = vmatprep.subr.bf16.mxu0 0
  %428 = vmatpush1.bf16.msra.mxu0 %v411
  %429 = vmatprep.subr.bf16.mxu0 0
  %430 = vmatpush1.bf16.msra.mxu0 %v412
  %431 = vmatprep.subr.bf16.mxu0 0
  %432 = vmatpush1.bf16.msra.mxu0 %v413
  %433 = vmatprep.subr.bf16.mxu0 0
  %434 = vmatpush1.bf16.msra.mxu0 %v414
  %435 = vmatprep.subr.bf16.mxu0 0
  %436 = vmatpush1.bf16.msra.mxu0 %v415
  %437 = vmatprep.subr.bf16.mxu0 0
  %438 = vmatpush1.bf16.msra.mxu0 %v416
  %439 = vmatprep.subr.bf16.mxu0 0
  %440 = vmatpush1.bf16.msra.mxu0 %v417
  %441 = vmatprep.subr.bf16.mxu0 0
  %442 = vmatpush1.bf16.msra.mxu0 %v418
  %443 = vmatprep.subr.bf16.mxu0 0
  %444 = vmatpush1.bf16.msra.mxu0 0
  %445 = vmatprep.subr.bf16.mxu0 0
  %446 = vmatpush1.bf16.msra.mxu0 0
  %447 = vmatprep.subr.bf16.mxu0 0
  %448 = vmatpush1.bf16.msra.mxu0 0
  %449 = vmatprep.subr.bf16.mxu0 0
  %450 = vmatpush1.bf16.msra.mxu0 0
  %451 = vmatprep.subr.bf16.mxu0 0
  %452 = vmatpush1.bf16.msra.mxu0 0
  %453 = vmatprep.subr.bf16.mxu0 0
  %454 = vmatpush1.bf16.msra.mxu0 0
  %455 = vmatprep.subr.bf16.mxu0 0
  %456 = vmatpush1.bf16.msra.mxu0 0
  %457 = vmatprep.subr.bf16.mxu0 0
  %458 = vmatpush1.bf16.msra.mxu0 0
  %459 = vmatprep.mubr.bf16.mxu0 0
  %460 = vmatmul.mubr.bf16.gmra.mrb[0].mxu0 %v340
  %v461 = vpop.f32.mrb[0].mxu0
  %v462 = vadd.f32 %v377, %v461
  %v463 = vpop.f32.mrb[0].mxu0
  %v464 = vpop.f32.mrb[0].mxu0
  %v465 = vadd.f32 %v377, %v464
  %v466 = vpop.f32.mrb[0].mxu0
  %467 = vmatprep.mubr.bf16.mxu0 0
  %468 = vmatmul.mubr.bf16.gmra.mrb[0].mxu0 %v341
  %v469 = vpop.f32.mrb[0].mxu0
  %v470 = vadd.f32 %v377, %v469
  %v471 = vpop.f32.mrb[0].mxu0
  %v472 = vpop.f32.mrb[0].mxu0
  %v473 = vadd.f32 %v377, %v472
  %v474 = vpop.f32.mrb[0].mxu0
  %475 = vmatprep.mubr.bf16.mxu0 0
  %476 = vmatmul.mubr.bf16.gmra.mrb[0].mxu0 %v342
  %v477 = vpop.f32.mrb[0].mxu0
  %v478 = vadd.f32 %v377, %v477
  %v479 = vpop.f32.mrb[0].mxu0
  %v480 = vpop.f32.mrb[0].mxu0
  %v481 = vadd.f32 %v377, %v480
  %v482 = vpop.f32.mrb[0].mxu0
  %483 = vmatprep.mubr.bf16.mxu0 0
  %484 = vmatmul.mubr.bf16.gmra.mrb[0].mxu0 %v343
  %v485 = vpop.f32.mrb[0].mxu0
  %v486 = vadd.f32 %v377, %v485
  %v487 = vpop.f32.mrb[0].mxu0
  %v488 = vpop.f32.mrb[0].mxu0
  %v489 = vadd.f32 %v377, %v488
  %v490 = vpop.f32.mrb[0].mxu0
  %491 = vmatprep.mubr.bf16.mxu0 0
  %492 = vmatmul.mubr.bf16.gmra.mrb[0].mxu0 %v344
  %v493 = vpop.f32.mrb[0].mxu0
  %v494 = vadd.f32 %v377, %v493
  %v495 = vpop.f32.mrb[0].mxu0
  %v496 = vpop.f32.mrb[0].mxu0
  %v497 = vadd.f32 %v377, %v496
  %v498 = vpop.f32.mrb[0].mxu0
  %499 = vmatprep.mubr.bf16.mxu0 0
  %500 = vmatmul.mubr.bf16.gmra.mrb[0].mxu0 %v345
  %v501 = vpop.f32.mrb[0].mxu0
  %v502 = vadd.f32 %v377, %v501
  %v503 = vpop.f32.mrb[0].mxu0
  %v504 = vpop.f32.mrb[0].mxu0
  %v505 = vadd.f32 %v377, %v504
  %v506 = vpop.f32.mrb[0].mxu0
  %507 = vmatprep.mubr.bf16.mxu0 0
  %508 = vmatmul.mubr.bf16.gmra.mrb[0].mxu0 %v346
  %v509 = vpop.f32.mrb[0].mxu0
  %v510 = vadd.f32 %v377, %v509
  %v511 = vpop.f32.mrb[0].mxu0
  %v512 = vpop.f32.mrb[0].mxu0
  %v513 = vadd.f32 %v377, %v512
  %v514 = vpop.f32.mrb[0].mxu0
  %515 = vmatprep.mubr.bf16.mxu0 0
  %516 = vmatmul.mubr.bf16.gmra.mrb[0].mxu0 %v347
  %v517 = vpop.f32.mrb[0].mxu0
  %v518 = vadd.f32 %v377, %v517
  %v519 = vpop.f32.mrb[0].mxu0
  %v520 = vpop.f32.mrb[0].mxu0
  %v521 = vadd.f32 %v377, %v520
  %v522 = vpop.f32.mrb[0].mxu0
  %523 = vmatprep.mubr.bf16.mxu0 0
  %524 = vmatmul.mubr.bf16.gmra.mrb[0].mxu0 %v348
  %v525 = vpop.f32.mrb[0].mxu0
  %v526 = vadd.f32 %v377, %v525
  %v527 = vpop.f32.mrb[0].mxu0
  %v528 = vpop.f32.mrb[0].mxu0
  %v529 = vadd.f32 %v377, %v528
  %v530 = vpop.f32.mrb[0].mxu0
  %531 = vmatprep.mubr.bf16.mxu0 0
  %532 = vmatmul.mubr.bf16.gmra.mrb[0].mxu0 %v349
  %v533 = vpop.f32.mrb[0].mxu0
  %v534 = vadd.f32 %v377, %v533
  %v535 = vpop.f32.mrb[0].mxu0
  %v536 = vpop.f32.mrb[0].mxu0
  %v537 = vadd.f32 %v377, %v536
  %v538 = vpop.f32.mrb[0].mxu0
  %539 = vmatprep.mubr.bf16.mxu0 0
  %540 = vmatmul.mubr.bf16.gmra.mrb[0].mxu0 %v350
  %v541 = vpop.f32.mrb[0].mxu0
  %v542 = vadd.f32 %v377, %v541
  %v543 = vpop.f32.mrb[0].mxu0
  %v544 = vpop.f32.mrb[0].mxu0
  %v545 = vadd.f32 %v377, %v544
  %v546 = vpop.f32.mrb[0].mxu0
  %547 = vmatprep.mubr.bf16.mxu0 0
  %548 = vmatmul.mubr.bf16.gmra.mrb[0].mxu0 %v351
  %v549 = vpop.f32.mrb[0].mxu0
  %v550 = vadd.f32 %v377, %v549
  %v551 = vpop.f32.mrb[0].mxu0
  %v552 = vpop.f32.mrb[0].mxu0
  %v553 = vadd.f32 %v377, %v552
  %v554 = vpop.f32.mrb[0].mxu0
  %555 = vmatprep.mubr.bf16.mxu0 0
  %556 = vmatmul.mubr.bf16.gmra.mrb[0].mxu0 %v352
  %v557 = vpop.f32.mrb[0].mxu0
  %v558 = vadd.f32 %v377, %v557
  %v559 = vpop.f32.mrb[0].mxu0
  %v560 = vpop.f32.mrb[0].mxu0
  %v561 = vadd.f32 %v377, %v560
  %v562 = vpop.f32.mrb[0].mxu0
  %563 = vmatprep.mubr.bf16.mxu0 0
  %564 = vmatmul.mubr.bf16.gmra.mrb[0].mxu0 %v353
  %v565 = vpop.f32.mrb[0].mxu0
  %v566 = vadd.f32 %v377, %v565
  %v567 = vpop.f32.mrb[0].mxu0
  %v568 = vpop.f32.mrb[0].mxu0
  %v569 = vadd.f32 %v377, %v568
  %v570 = vpop.f32.mrb[0].mxu0
  %571 = vmatprep.mubr.bf16.mxu0 0
  %572 = vmatmul.mubr.bf16.gmra.mrb[0].mxu0 %v354
  %v573 = vpop.f32.mrb[0].mxu0
  %v574 = vadd.f32 %v377, %v573
  %v575 = vpop.f32.mrb[0].mxu0
  %v576 = vpop.f32.mrb[0].mxu0
  %v577 = vadd.f32 %v377, %v576
  %v578 = vpop.f32.mrb[0].mxu0
  %579 = vmatprep.mubr.bf16.mxu0 0
  %580 = vmatmul.mubr.bf16.gmra.mrb[0].mxu0 %v355
  %v581 = vpop.f32.mrb[0].mxu0
  %v582 = vadd.f32 %v377, %v581
  %v583 = vpop.f32.mrb[0].mxu0
  %v584 = vpop.f32.mrb[0].mxu0
  %v585 = vadd.f32 %v377, %v584
  %v586 = vpop.f32.mrb[0].mxu0
  %587 = vdwg.mxu0
  %v588 = vmax.f32 %v462, 0.0
  %v589 = vmax.f32 %v465, 0.0
  %v590 = vmax.f32 %v470, 0.0
  %v591 = vmax.f32 %v473, 0.0
  %v592 = vmax.f32 %v478, 0.0
  %v593 = vmax.f32 %v481, 0.0
  %v594 = vmax.f32 %v486, 0.0
  %v595 = vmax.f32 %v489, 0.0
  %v596 = vmax.f32 %v494, 0.0
  %v597 = vmax.f32 %v497, 0.0
  %v598 = vmax.f32 %v502, 0.0
  %v599 = vmax.f32 %v505, 0.0
  %v600 = vmax.f32 %v510, 0.0
  %v601 = vmax.f32 %v513, 0.0
  %v602 = vmax.f32 %v518, 0.0
  %v603 = vmax.f32 %v521, 0.0
  %v604 = vmax.f32 %v526, 0.0
  %v605 = vmax.f32 %v529, 0.0
  %v606 = vmax.f32 %v534, 0.0
  %v607 = vmax.f32 %v537, 0.0
  %v608 = vmax.f32 %v542, 0.0
  %v609 = vmax.f32 %v545, 0.0
  %v610 = vmax.f32 %v550, 0.0
  %v611 = vmax.f32 %v553, 0.0
  %v612 = vmax.f32 %v558, 0.0
  %v613 = vmax.f32 %v561, 0.0
  %v614 = vmax.f32 %v566, 0.0
  %v615 = vmax.f32 %v569, 0.0
  %v616 = vmax.f32 %v574, 0.0
  %v617 = vmax.f32 %v577, 0.0
  %v618 = vmax.f32 %v582, 0.0
  %v619 = vmax.f32 %v585, 0.0
  %v620 = vpack.c.bf16 %v589, %v588
  %v621 = vpack.c.bf16 %v591, %v590
  %v622 = vpack.c.bf16 %v593, %v592
  %v623 = vpack.c.bf16 %v595, %v594
  %v624 = vpack.c.bf16 %v597, %v596
  %v625 = vpack.c.bf16 %v599, %v598
  %v626 = vpack.c.bf16 %v601, %v600
  %v627 = vpack.c.bf16 %v603, %v602
  %v628 = vpack.c.bf16 %v605, %v604
  %v629 = vpack.c.bf16 %v607, %v606
  %v630 = vpack.c.bf16 %v609, %v608
  %v631 = vpack.c.bf16 %v611, %v610
  %v632 = vpack.c.bf16 %v613, %v612
  %v633 = vpack.c.bf16 %v615, %v614
  %v634 = vpack.c.bf16 %v617, %v616
  %v635 = vpack.c.bf16 %v619, %v618
  %v636 = vld [vmem:[%s5] sm:$0xf]
  %v637 = vld [vmem:[%s5 + $0x4] sm:$0xf]
  %v638 = vld [vmem:[%s5 + $0x8] sm:$0xf]
  %v639 = vld [vmem:[%s5 + $0xc] sm:$0xf]
  %v640 = vld [vmem:[%s5 + $0x10] sm:$0xf]
  %v641 = vld [vmem:[%s5 + $0x14] sm:$0xf]
  %v642 = vld [vmem:[%s5 + $0x18] sm:$0xf]
  %v643 = vld [vmem:[%s5 + $0x1c] sm:$0xf]
  %v644 = vld [vmem:[%s6] sm:$0x1]
  %v646 = vlaneseq
  %v647 = vshrl.u32 %v646, 7
  %v648 = vsub.s32 0, %v647
  %v649 = vrot.slane %v644, %v648
  %v659 = vunpack.c.l.b16 %v636
  %v660 = vunpack.c.l.b16 %v637
  %v661 = vunpack.c.l.b16 %v638
  %v662 = vunpack.c.l.b16 %v639
  %v663 = vunpack.c.l.b16 %v640
  %v664 = vunpack.c.l.b16 %v641
  %v665 = vunpack.c.l.b16 %v642
  %v666 = vunpack.c.l.b16 %v643
  %v667 = vpack.c.b16 %v660, %v659
  %v668 = vpack.c.b16 %v662, %v661
  %v669 = vpack.c.b16 %v664, %v663
  %v670 = vpack.c.b16 %v666, %v665
  %vm675 = vcmask 523264
  %v677 = vsel %vm675, %v620, 0
  %v680 = vsel %vm675, %v621, 0
  %v683 = vsel %vm675, %v622, 0
  %v686 = vsel %vm675, %v623, 0
  %v689 = vsel %vm675, %v624, 0
  %v692 = vsel %vm675, %v625, 0
  %v695 = vsel %vm675, %v626, 0
  %v698 = vsel %vm675, %v627, 0
  %v701 = vsel %vm675, %v628, 0
  %v704 = vsel %vm675, %v629, 0
  %v707 = vsel %vm675, %v630, 0
  %v710 = vsel %vm675, %v631, 0
  %v713 = vsel %vm675, %v632, 0
  %v716 = vsel %vm675, %v633, 0
  %v719 = vsel %vm675, %v634, 0
  %v722 = vsel %vm675, %v635, 0
  %724 = vmatprep.subr.bf16.mxu0 0
  %725 = vmatpush1.bf16.msra.mxu0 %v667
  %726 = vmatprep.subr.bf16.mxu0 0
  %727 = vmatpush1.bf16.msra.mxu0 %v668
  %728 = vmatprep.subr.bf16.mxu0 0
  %729 = vmatpush1.bf16.msra.mxu0 %v669
  %730 = vmatprep.subr.bf16.mxu0 0
  %731 = vmatpush1.bf16.msra.mxu0 %v670
  %732 = vmatprep.subr.bf16.mxu0 0
  %733 = vmatpush1.bf16.msra.mxu0 0
  %734 = vmatprep.subr.bf16.mxu0 0
  %735 = vmatpush1.bf16.msra.mxu0 0
  %736 = vmatprep.subr.bf16.mxu0 0
  %737 = vmatpush1.bf16.msra.mxu0 0
  %738 = vmatprep.subr.bf16.mxu0 0
  %739 = vmatpush1.bf16.msra.mxu0 0
  %740 = vmatprep.subr.bf16.mxu0 0
  %741 = vmatpush1.bf16.msra.mxu0 0
  %742 = vmatprep.subr.bf16.mxu0 0
  %743 = vmatpush1.bf16.msra.mxu0 0
  %744 = vmatprep.subr.bf16.mxu0 0
  %745 = vmatpush1.bf16.msra.mxu0 0
  %746 = vmatprep.subr.bf16.mxu0 0
  %747 = vmatpush1.bf16.msra.mxu0 0
  %748 = vmatprep.subr.bf16.mxu0 0
  %749 = vmatpush1.bf16.msra.mxu0 0
  %750 = vmatprep.subr.bf16.mxu0 0
  %751 = vmatpush1.bf16.msra.mxu0 0
  %752 = vmatprep.subr.bf16.mxu0 0
  %753 = vmatpush1.bf16.msra.mxu0 0
  %754 = vmatprep.subr.bf16.mxu0 0
  %755 = vmatpush1.bf16.msra.mxu0 0
  %756 = vmatprep.mubr.bf16.mxu0 0
  %757 = vmatmul.mubr.bf16.gmra.mrb[0].mxu0 %v677
  %v758 = vpop.f32.mrb[0].mxu0
  %v759 = vadd.f32 %v649, %v758
  %v760 = vpop.f32.mrb[0].mxu0
  %v761 = vpop.f32.mrb[0].mxu0
  %v762 = vadd.f32 %v649, %v761
  %v763 = vpop.f32.mrb[0].mxu0
  %764 = vmatprep.mubr.bf16.mxu0 0
  %765 = vmatmul.mubr.bf16.gmra.mrb[0].mxu0 %v680
  %v766 = vpop.f32.mrb[0].mxu0
  %v767 = vadd.f32 %v649, %v766
  %v768 = vpop.f32.mrb[0].mxu0
  %v769 = vpop.f32.mrb[0].mxu0
  %v770 = vadd.f32 %v649, %v769
  %v771 = vpop.f32.mrb[0].mxu0
  %772 = vmatprep.mubr.bf16.mxu0 0
  %773 = vmatmul.mubr.bf16.gmra.mrb[0].mxu0 %v683
  %v774 = vpop.f32.mrb[0].mxu0
  %v775 = vadd.f32 %v649, %v774
  %v776 = vpop.f32.mrb[0].mxu0
  %v777 = vpop.f32.mrb[0].mxu0
  %v778 = vadd.f32 %v649, %v777
  %v779 = vpop.f32.mrb[0].mxu0
  %780 = vmatprep.mubr.bf16.mxu0 0
  %781 = vmatmul.mubr.bf16.gmra.mrb[0].mxu0 %v686
  %v782 = vpop.f32.mrb[0].mxu0
  %v783 = vadd.f32 %v649, %v782
  %v784 = vpop.f32.mrb[0].mxu0
  %v785 = vpop.f32.mrb[0].mxu0
  %v786 = vadd.f32 %v649, %v785
  %v787 = vpop.f32.mrb[0].mxu0
  %788 = vmatprep.mubr.bf16.mxu0 0
  %789 = vmatmul.mubr.bf16.gmra.mrb[0].mxu0 %v689
  %v790 = vpop.f32.mrb[0].mxu0
  %v791 = vadd.f32 %v649, %v790
  %v792 = vpop.f32.mrb[0].mxu0
  %v793 = vpop.f32.mrb[0].mxu0
  %v794 = vadd.f32 %v649, %v793
  %v795 = vpop.f32.mrb[0].mxu0
  %796 = vmatprep.mubr.bf16.mxu0 0
  %797 = vmatmul.mubr.bf16.gmra.mrb[0].mxu0 %v692
  %v798 = vpop.f32.mrb[0].mxu0
  %v799 = vadd.f32 %v649, %v798
  %v800 = vpop.f32.mrb[0].mxu0
  %v801 = vpop.f32.mrb[0].mxu0
  %v802 = vadd.f32 %v649, %v801
  %v803 = vpop.f32.mrb[0].mxu0
  %804 = vmatprep.mubr.bf16.mxu0 0
  %805 = vmatmul.mubr.bf16.gmra.mrb[0].mxu0 %v695
  %v806 = vpop.f32.mrb[0].mxu0
  %v807 = vadd.f32 %v649, %v806
  %v808 = vpop.f32.mrb[0].mxu0
  %v809 = vpop.f32.mrb[0].mxu0
  %v810 = vadd.f32 %v649, %v809
  %v811 = vpop.f32.mrb[0].mxu0
  %812 = vmatprep.mubr.bf16.mxu0 0
  %813 = vmatmul.mubr.bf16.gmra.mrb[0].mxu0 %v698
  %v814 = vpop.f32.mrb[0].mxu0
  %v815 = vadd.f32 %v649, %v814
  %v816 = vpop.f32.mrb[0].mxu0
  %v817 = vpop.f32.mrb[0].mxu0
  %v818 = vadd.f32 %v649, %v817
  %v819 = vpop.f32.mrb[0].mxu0
  %820 = vmatprep.mubr.bf16.mxu0 0
  %821 = vmatmul.mubr.bf16.gmra.mrb[0].mxu0 %v701
  %v822 = vpop.f32.mrb[0].mxu0
  %v823 = vadd.f32 %v649, %v822
  %v824 = vpop.f32.mrb[0].mxu0
  %v825 = vpop.f32.mrb[0].mxu0
  %v826 = vadd.f32 %v649, %v825
  %v827 = vpop.f32.mrb[0].mxu0
  %828 = vmatprep.mubr.bf16.mxu0 0
  %829 = vmatmul.mubr.bf16.gmra.mrb[0].mxu0 %v704
  %v830 = vpop.f32.mrb[0].mxu0
  %v831 = vadd.f32 %v649, %v830
  %v832 = vpop.f32.mrb[0].mxu0
  %v833 = vpop.f32.mrb[0].mxu0
  %v834 = vadd.f32 %v649, %v833
  %v835 = vpop.f32.mrb[0].mxu0
  %836 = vmatprep.mubr.bf16.mxu0 0
  %837 = vmatmul.mubr.bf16.gmra.mrb[0].mxu0 %v707
  %v838 = vpop.f32.mrb[0].mxu0
  %v839 = vadd.f32 %v649, %v838
  %v840 = vpop.f32.mrb[0].mxu0
  %v841 = vpop.f32.mrb[0].mxu0
  %v842 = vadd.f32 %v649, %v841
  %v843 = vpop.f32.mrb[0].mxu0
  %844 = vmatprep.mubr.bf16.mxu0 0
  %845 = vmatmul.mubr.bf16.gmra.mrb[0].mxu0 %v710
  %v846 = vpop.f32.mrb[0].mxu0
  %v847 = vadd.f32 %v649, %v846
  %v848 = vpop.f32.mrb[0].mxu0
  %v849 = vpop.f32.mrb[0].mxu0
  %v850 = vadd.f32 %v649, %v849
  %v851 = vpop.f32.mrb[0].mxu0
  %852 = vmatprep.mubr.bf16.mxu0 0
  %853 = vmatmul.mubr.bf16.gmra.mrb[0].mxu0 %v713
  %v854 = vpop.f32.mrb[0].mxu0
  %v855 = vadd.f32 %v649, %v854
  %v856 = vpop.f32.mrb[0].mxu0
  %v857 = vpop.f32.mrb[0].mxu0
  %v858 = vadd.f32 %v649, %v857
  %v859 = vpop.f32.mrb[0].mxu0
  %860 = vmatprep.mubr.bf16.mxu0 0
  %861 = vmatmul.mubr.bf16.gmra.mrb[0].mxu0 %v716
  %v862 = vpop.f32.mrb[0].mxu0
  %v863 = vadd.f32 %v649, %v862
  %v864 = vpop.f32.mrb[0].mxu0
  %v865 = vpop.f32.mrb[0].mxu0
  %v866 = vadd.f32 %v649, %v865
  %v867 = vpop.f32.mrb[0].mxu0
  %868 = vmatprep.mubr.bf16.mxu0 0
  %869 = vmatmul.mubr.bf16.gmra.mrb[0].mxu0 %v719
  %v870 = vpop.f32.mrb[0].mxu0
  %v871 = vadd.f32 %v649, %v870
  %v872 = vpop.f32.mrb[0].mxu0
  %v873 = vpop.f32.mrb[0].mxu0
  %v874 = vadd.f32 %v649, %v873
  %v875 = vpop.f32.mrb[0].mxu0
  %876 = vmatprep.mubr.bf16.mxu0 0
  %877 = vmatmul.mubr.bf16.gmra.mrb[0].mxu0 %v722
  %v878 = vpop.f32.mrb[0].mxu0
  %v879 = vadd.f32 %v649, %v878
  %v880 = vpop.f32.mrb[0].mxu0
  %v881 = vpop.f32.mrb[0].mxu0
  %v882 = vadd.f32 %v649, %v881
  %v883 = vpop.f32.mrb[0].mxu0
  %884 = vdwg.mxu0
  %vm885 = vcmask 64512
  %886 = vst.msk [vmem:[%s7] sm:$0xff] %vm885, %v759
  %887 = vst.msk [vmem:[%s7 + $0x8] sm:$0xff] %vm885, %v762
  %888 = vst.msk [vmem:[%s7 + $0x10] sm:$0xff] %vm885, %v767
  %889 = vst.msk [vmem:[%s7 + $0x18] sm:$0xff] %vm885, %v770
  %890 = vst.msk [vmem:[%s7 + $0x20] sm:$0xff] %vm885, %v775
  %891 = vst.msk [vmem:[%s7 + $0x28] sm:$0xff] %vm885, %v778
  %892 = vst.msk [vmem:[%s7 + $0x30] sm:$0xff] %vm885, %v783
  %893 = vst.msk [vmem:[%s7 + $0x38] sm:$0xff] %vm885, %v786
  %894 = vst.msk [vmem:[%s7 + $0x40] sm:$0xff] %vm885, %v791
  %895 = vst.msk [vmem:[%s7 + $0x48] sm:$0xff] %vm885, %v794
  %896 = vst.msk [vmem:[%s7 + $0x50] sm:$0xff] %vm885, %v799
  %897 = vst.msk [vmem:[%s7 + $0x58] sm:$0xff] %vm885, %v802
  %898 = vst.msk [vmem:[%s7 + $0x60] sm:$0xff] %vm885, %v807
  %899 = vst.msk [vmem:[%s7 + $0x68] sm:$0xff] %vm885, %v810
  %900 = vst.msk [vmem:[%s7 + $0x70] sm:$0xff] %vm885, %v815
  %901 = vst.msk [vmem:[%s7 + $0x78] sm:$0xff] %vm885, %v818
  %902 = vst.msk [vmem:[%s7 + $0x80] sm:$0xff] %vm885, %v823
  %903 = vst.msk [vmem:[%s7 + $0x88] sm:$0xff] %vm885, %v826
  %904 = vst.msk [vmem:[%s7 + $0x90] sm:$0xff] %vm885, %v831
  %905 = vst.msk [vmem:[%s7 + $0x98] sm:$0xff] %vm885, %v834
  %906 = vst.msk [vmem:[%s7 + $0xa0] sm:$0xff] %vm885, %v839
  %907 = vst.msk [vmem:[%s7 + $0xa8] sm:$0xff] %vm885, %v842
  %908 = vst.msk [vmem:[%s7 + $0xb0] sm:$0xff] %vm885, %v847
  %909 = vst.msk [vmem:[%s7 + $0xb8] sm:$0xff] %vm885, %v850
  %910 = vst.msk [vmem:[%s7 + $0xc0] sm:$0xff] %vm885, %v855
  %911 = vst.msk [vmem:[%s7 + $0xc8] sm:$0xff] %vm885, %v858
  %912 = vst.msk [vmem:[%s7 + $0xd0] sm:$0xff] %vm885, %v863
  %913 = vst.msk [vmem:[%s7 + $0xd8] sm:$0xff] %vm885, %v866
  %914 = vst.msk [vmem:[%s7 + $0xe0] sm:$0xff] %vm885, %v871
  %915 = vst.msk [vmem:[%s7 + $0xe8] sm:$0xff] %vm885, %v874
  %916 = vst.msk [vmem:[%s7 + $0xf0] sm:$0xff] %vm885, %v879
  %917 = vst.msk [vmem:[%s7 + $0xf8] sm:$0xff] %vm885, %v882
  // Predicated region
  $region30: #{tpu_custom_call.1} parent=0 // pred_check
    _
  $region31: #{tpu_custom_call.1} parent=0 // pred_check_branch
    %919 = sbr.rel (0) target = $region33
  $region32: #{tpu_custom_call.1} parent=0 // pred_region
    _
  $region33: #{tpu_custom_call.1} parent=0 // pred_fallthru
    _
  // Predicated region
  $region34: #{tpu_custom_call.1} parent=0 // pred_check
    _
  $region35: #{tpu_custom_call.1} parent=0 // pred_check_branch
    %921 = sbr.rel (0) target = $region37
  $region36: #{tpu_custom_call.1} parent=0 // pred_region
    _
  $region37: #{tpu_custom_call.1} parent=0 // pred_fallthru
    _

</llo_original>
